<compile_context>
chip_gen: v7x
topology: tpu7x:2x2x1
jax: 0.10.0
libtpu: 0.0.40
codegen_flags: <defaults>
</compile_context>

<pallas_src>
import functools

import jax
import jax.numpy as jnp
from jax.experimental import pallas as pl
from jax.experimental.pallas import tpu as pltpu

L1, L2, L3, L4 = 4, 20, 10, 2
EPS = 1e-12          # F.normalize default eps
LANES = 128          # TPU lane width; hidden/output dims are zero-padded to this

# Parameter-slab layout: one (SLAB_ROWS, 128) f32 buffer, (8,128)-aligned blocks.
W1_ROW = 0           # rows   0:4    W1  (4  x 20 real, zero-padded to  4 x 128)
W2_ROW = 8           # rows   8:136  W2  (20 x 10 real, zero-padded to 128 x 128)
W3_ROW = 136         # rows 136:264  W3  (10 x  2 real, zero-padded to 128 x 128)
B_ROW = 264          # rows 264/265/266 = b1 / b2 / b3 (each 1 x 128, zero-padded)
SLAB_ROWS = 272      # multiple of 8 sublanes


def dqnet_kernel(inv_ref, x_ref, p_ref, o_ref):
    # x tile: (TM, 4). inv_ref: (1, 4) = 1/max(||col||_2, eps) over the FULL batch.
    xn = x_ref[...] * inv_ref[...]

    w1 = p_ref[W1_ROW:W1_ROW + L1, :]        # (4, 128)
    w2 = p_ref[W2_ROW:W2_ROW + LANES, :]     # (128, 128)
    w3 = p_ref[W3_ROW:W3_ROW + LANES, :]     # (128, 128)
    biases = p_ref[B_ROW:B_ROW + 8, :]       # aligned (8, 128) load
    b1 = biases[0:1, :]
    b2 = biases[1:2, :]
    b3 = biases[2:3, :]

    # Zero padding in the slab keeps all padded hidden/output columns exactly 0.
    h1 = jnp.maximum(jnp.dot(xn, w1, preferred_element_type=jnp.float32) + b1, 0.0)
    h2 = jnp.maximum(jnp.dot(h1, w2, preferred_element_type=jnp.float32) + b2, 0.0)
    y = jnp.dot(h2, w3, preferred_element_type=jnp.float32) + b3

    o_ref[...] = y                           # lane-dense (TM, 128) store


def _round_up(n, m):
    return (n + m - 1) // m * m


def column_inv_norm(x):
    """1 / max(||column||_2, eps) over dim=0, matching F.normalize(x, dim=0)."""
    xf = x.astype(jnp.float32)
    sumsq = jnp.sum(xf * xf, axis=0, keepdims=True)
    return jax.lax.rsqrt(jnp.maximum(sumsq, jnp.float32(EPS) ** 2))


@functools.partial(jax.jit, static_argnames=("tm",))
def dqnet_forward(x, packed_params, *, tm=512):
    B = x.shape[0]
    x = x.astype(jnp.float32)
    inv = column_inv_norm(x)                         # full-batch normalization factor

    tm_eff = min(tm, _round_up(B, 8))                # sublane-aligned batch tile
    Bp = _round_up(B, tm_eff)
    if Bp != B:
        x = jnp.pad(x, ((0, Bp - B), (0, 0)))        # zero rows don't change col norms

    out = pl.pallas_call(
        dqnet_kernel,
        out_shape=jax.ShapeDtypeStruct((Bp, LANES), jnp.float32),
        grid_spec=pltpu.PrefetchScalarGridSpec(
            num_scalar_prefetch=0,
            grid=(Bp // tm_eff,),
            in_specs=[
                pl.BlockSpec((1, L1), lambda i: (0, 0)),             # inv-norm, resident
                pl.BlockSpec((tm_eff, L1), lambda i: (i, 0)),        # x tile (streamed)
                pl.BlockSpec((SLAB_ROWS, LANES), lambda i: (0, 0)),  # packed params, resident
            ],
            out_specs=pl.BlockSpec((tm_eff, LANES), lambda i: (i, 0)),
        ),
        compiler_params=pltpu.CompilerParams(dimension_semantics=("parallel",)),
    )(inv, x, packed_params)
    return out[:B, :L4]


def init_params(key):
    """PyTorch nn.Linear-style init (U[-1/sqrt(fan_in), 1/sqrt(fan_in)]).
    Weights stored as [in, out] (transposed vs PyTorch's [out, in]); biases [1, out]."""
    ks = jax.random.split(key, 6)

    def lin(kw, kb, fan_in, fan_out):
        bound = 1.0 / jnp.sqrt(jnp.float32(fan_in))
        w = jax.random.uniform(kw, (fan_in, fan_out), jnp.float32, -bound, bound)
        b = jax.random.uniform(kb, (1, fan_out), jnp.float32, -bound, bound)
        return w, b

    w1, b1 = lin(ks[0], ks[1], L1, L2)
    w2, b2 = lin(ks[2], ks[3], L2, L3)
    w3, b3 = lin(ks[4], ks[5], L3, L4)
    return (w1, b1, w2, b2, w3, b3)


def pack_params(params):
    """Pack all weights/biases into one (8,128)-aligned f32 slab (single DMA)."""
    w1, b1, w2, b2, w3, b3 = params
    slab = jnp.zeros((SLAB_ROWS, LANES), jnp.float32)
    slab = slab.at[W1_ROW:W1_ROW + L1, :L2].set(w1)
    slab = slab.at[W2_ROW:W2_ROW + L2, :L3].set(w2)
    slab = slab.at[W3_ROW:W3_ROW + L3, :L4].set(w3)
    slab = slab.at[B_ROW + 0, :L2].set(b1[0])
    slab = slab.at[B_ROW + 1, :L3].set(b2[0])
    slab = slab.at[B_ROW + 2, :L4].set(b3[0])
    return slab


def dqnet_reference(x, params):
    """Pure-JAX reference (unpacked params) for correctness checking."""
    w1, b1, w2, b2, w3, b3 = params
    hp = jax.lax.Precision.HIGHEST
    xn = x.astype(jnp.float32) * column_inv_norm(x)
    h1 = jnp.maximum(jnp.dot(xn, w1, precision=hp) + b1, 0.0)
    h2 = jnp.maximum(jnp.dot(h1, w2, precision=hp) + b2, 0.0)
    return jnp.dot(h2, w3, precision=hp) + b3


if __name__ == "__main__":
    key = jax.random.PRNGKey(0)
    k_x, k_p = jax.random.split(key)

    params = init_params(k_p)
    packed = pack_params(params)

    # Small batch of CartPole states (each state has 4 features).
    B = 8
    x = jax.random.normal(k_x, (B, L1), dtype=jnp.float32)
    out = jax.block_until_ready(dqnet_forward(x, packed))
    ref = dqnet_reference(x, params)
    assert out.shape == (B, L4)
    assert jnp.allclose(out, ref, atol=1e-5, rtol=1e-5), "mismatch vs reference (B=8)"

    # Larger batch exercising the parallel batch grid with VMEM-resident weights.
    B2 = 1024
    x2 = jax.random.normal(jax.random.PRNGKey(1), (B2, L1), dtype=jnp.float32)
    out2 = jax.block_until_ready(dqnet_forward(x2, packed, tm=512))
    ref2 = dqnet_reference(x2, params)
    assert out2.shape == (B2, L4)
    assert jnp.allclose(out2, ref2, atol=1e-5, rtol=1e-5), "mismatch vs reference (B=1024)"

    print("KERNEL_OK")
</pallas_src>

<mosaic_0001>
module attributes {stable_mosaic.version = 11 : i64} {
  func.func @dqnet_kernel(%arg0: i32, %arg1: memref<1x4xf32, #tpu.memory_space<vmem>>, %arg2: memref<8x4xf32, #tpu.memory_space<vmem>>, %arg3: memref<272x128xf32, #tpu.memory_space<vmem>>, %arg4: memref<8x128xf32, #tpu.memory_space<vmem>>) attributes {dimension_semantics = [#tpu.dimension_semantics<parallel>], iteration_bounds = array<i64: 1>, scalar_prefetch = 0 : i64, scratch_operands = 0 : i64, tpu.core_type = #tpu.core_type<tc>, window_params = [{pipeline_mode = #tpu.pipeline_mode<synchronous>, transform_indices = @transform_0, window_bounds = array<i64: 1, 4>}, {transform_indices = @transform_1, window_bounds = array<i64: 8, 4>}, {pipeline_mode = #tpu.pipeline_mode<synchronous>, transform_indices = @transform_2, window_bounds = array<i64: 272, 128>}, {transform_indices = @transform_3, window_bounds = array<i64: 8, 128>}]} {
    %c0 = arith.constant 0 : index
    %c0_0 = arith.constant 0 : index
    %0 = vector.load %arg2[%c0, %c0_0] : memref<8x4xf32, #tpu.memory_space<vmem>>, vector<8x4xf32>
    %c0_1 = arith.constant 0 : index
    %c0_2 = arith.constant 0 : index
    %1 = vector.load %arg1[%c0_1, %c0_2] : memref<1x4xf32, #tpu.memory_space<vmem>>, vector<1x4xf32>
    %2 = vector.broadcast %1 : vector<1x4xf32> to vector<8x4xf32>
    %3 = arith.mulf %0, %2 : vector<8x4xf32>
    %c0_3 = arith.constant 0 : index
    %c0_4 = arith.constant 0 : index
    %4 = vector.load %arg3[%c0_3, %c0_4] : memref<272x128xf32, #tpu.memory_space<vmem>>, vector<4x128xf32>
    %c8 = arith.constant 8 : index
    %c0_5 = arith.constant 0 : index
    %5 = vector.load %arg3[%c8, %c0_5] : memref<272x128xf32, #tpu.memory_space<vmem>>, vector<128x128xf32>
    %c136 = arith.constant 136 : index
    %c0_6 = arith.constant 0 : index
    %6 = vector.load %arg3[%c136, %c0_6] : memref<272x128xf32, #tpu.memory_space<vmem>>, vector<128x128xf32>
    %c264 = arith.constant 264 : index
    %c0_7 = arith.constant 0 : index
    %7 = vector.load %arg3[%c264, %c0_7] : memref<272x128xf32, #tpu.memory_space<vmem>>, vector<8x128xf32>
    %8 = vector.extract_strided_slice %7 {offsets = [0, 0], sizes = [1, 128], strides = [1, 1]} : vector<8x128xf32> to vector<1x128xf32>
    %9 = vector.extract_strided_slice %7 {offsets = [1, 0], sizes = [1, 128], strides = [1, 1]} : vector<8x128xf32> to vector<1x128xf32>
    %10 = vector.extract_strided_slice %7 {offsets = [2, 0], sizes = [1, 128], strides = [1, 1]} : vector<8x128xf32> to vector<1x128xf32>
    %cst = arith.constant dense<0.000000e+00> : vector<8x128xf32>
    %11 = tpu.matmul %3, %4, %cst {dimension_numbers = #tpu.dot_dimension_numbers<[1], [0], [0], [1], [0, 0, 1, 1], [], []>} : vector<8x4xf32>, vector<4x128xf32>, vector<8x128xf32> -> vector<8x128xf32>
    %12 = vector.broadcast %8 : vector<1x128xf32> to vector<8x128xf32>
    %13 = arith.addf %11, %12 : vector<8x128xf32>
    %cst_8 = arith.constant 0.000000e+00 : f32
    %14 = vector.broadcast %cst_8 : f32 to vector<8x128xf32>
    %15 = arith.maximumf %13, %14 : vector<8x128xf32>
    %cst_9 = arith.constant dense<0.000000e+00> : vector<8x128xf32>
    %16 = tpu.matmul %15, %5, %cst_9 {dimension_numbers = #tpu.dot_dimension_numbers<[1], [0], [0], [1], [0, 0, 1, 1], [], []>} : vector<8x128xf32>, vector<128x128xf32>, vector<8x128xf32> -> vector<8x128xf32>
    %17 = vector.broadcast %9 : vector<1x128xf32> to vector<8x128xf32>
    %18 = arith.addf %16, %17 : vector<8x128xf32>
    %cst_10 = arith.constant 0.000000e+00 : f32
    %19 = vector.broadcast %cst_10 : f32 to vector<8x128xf32>
    %20 = arith.maximumf %18, %19 : vector<8x128xf32>
    %cst_11 = arith.constant dense<0.000000e+00> : vector<8x128xf32>
    %21 = tpu.matmul %20, %6, %cst_11 {dimension_numbers = #tpu.dot_dimension_numbers<[1], [0], [0], [1], [0, 0, 1, 1], [], []>} : vector<8x128xf32>, vector<128x128xf32>, vector<8x128xf32> -> vector<8x128xf32>
    %22 = vector.broadcast %10 : vector<1x128xf32> to vector<8x128xf32>
    %23 = arith.addf %21, %22 : vector<8x128xf32>
    %c0_12 = arith.constant 0 : index
    %c0_13 = arith.constant 0 : index
    %24 = vector.load %arg4[%c0_12, %c0_13] : memref<8x128xf32, #tpu.memory_space<vmem>>, vector<8x128xf32>
    tpu.vector_store %arg4[%c0_12, %c0_13], %23 {strides = array<i32>} : memref<8x128xf32, #tpu.memory_space<vmem>>, vector<8x128xf32>,
    return
  }
  func.func @transform_0(%arg0: i32) -> (i32, i32) {
    %c0_i32 = arith.constant 0 : i32
    %c0_i32_0 = arith.constant 0 : i32
    %c0_i32_1 = arith.constant 0 : i32
    return %c0_i32, %c0_i32_0 : i32, i32
  }
  func.func @transform_1(%arg0: i32) -> (i32, i32) {
    %c0_i32 = arith.constant 0 : i32
    %c0_i32_0 = arith.constant 0 : i32
    return %arg0, %c0_i32 : i32, i32
  }
  func.func @transform_2(%arg0: i32) -> (i32, i32) {
    %c0_i32 = arith.constant 0 : i32
    %c0_i32_0 = arith.constant 0 : i32
    %c0_i32_1 = arith.constant 0 : i32
    return %c0_i32, %c0_i32_0 : i32, i32
  }
  func.func @transform_3(%arg0: i32) -> (i32, i32) {
    %c0_i32 = arith.constant 0 : i32
    %c0_i32_0 = arith.constant 0 : i32
    return %arg0, %c0_i32 : i32, i32
  }
}

</mosaic_0001>

<llo_original>
// kernel: dqnet_forward.1
$region0: #{dqnet_forward.1}
  #allocation0 [shape = 'u32[]', space=smem, size = 0x4, offset = 0x4, fixed_abs, tag = 'smem constant byte address 0x4 - core index']
  #allocation1 [shape = 'u32[144,128]{1,0:T(1,128)}', space=vmem, size = 0x12000, scoped, tag = 'internal scratch']
  %s0 = inlined_call_operand.vmem [shape: f32[1,4], index: 0, kind: input, shape index: {}]
  %s1 = inlined_call_operand.vmem [shape: f32[8,4], index: 1, kind: input, shape index: {}]
  %s2 = inlined_call_operand.hbm [shape: f32[272,128], index: 2, kind: input, shape index: {}]
  %s3 = inlined_call_operand.vmem [shape: f32[8,128], index: 3, kind: output, shape index: {}]
  %s4 = sld [smem:[#allocation0]]
  $region26: #{dqnet_forward.1} parent=0
    _
  %s6 = ssub.s32 1, %s4
  %s7 = scalar_select 0, %s6, %s4
  $region1: #{dqnet_forward.1} parent=0
    #allocation2 [shape = 'u8[139264]{0}', space=vmem, size = 0x22000, scoped, tag = 'input window, operand 2, single buffered']
    #allocation3 [shape = 's32[1]{0}', space=sflag, size = 0x4, scoped, tag = 'scoped memory for dqnet_forward.1']
    %8 = vsyncpa [#allocation3], 0
    // Predicated region
    $region2: #{dqnet_forward.1} parent=1 // pred_check
      _
    $region3: #{dqnet_forward.1} parent=1 // pred_check_branch
      %10 = sbr.rel (0) target = $region5
    $region4: #{dqnet_forward.1} parent=1 // pred_region
      _
    $region5: #{dqnet_forward.1} parent=1 // pred_fallthru
      _
    // Predicated region
    $region6: #{dqnet_forward.1} parent=1 // pred_check
      _
    $region7: #{dqnet_forward.1} parent=1 // pred_check_branch
      %12 = sbr.rel (0) target = $region9
    $region8: #{dqnet_forward.1} parent=1 // pred_region
      _
    $region9: #{dqnet_forward.1} parent=1 // pred_fallthru
      _
    // Predicated region
    $region10: #{dqnet_forward.1} parent=1 // pred_check
      _
    $region11: #{dqnet_forward.1} parent=1 // pred_check_branch
      %14 = sbr.rel (0) target = $region13
    $region12: #{dqnet_forward.1} parent=1 // pred_region
      %s16 = ssub.s32 4352, 4352
      %17 = vsyncadd [#allocation3], %s16
      %s18 = sshll.u32 [#allocation2], 4
      %s19 = int_to_ptr.vmem [resolvable:$true] %s18
      %24 = dma.hbm_to_vmem [thread:$0]  %s2, 4352, %s19, [#allocation3], 128, 128, 8
    $region13: #{dqnet_forward.1} parent=1 // pred_fallthru
      _
    // Predicated region
    $region14: #{dqnet_forward.1} parent=1 // pred_check
      _
    $region15: #{dqnet_forward.1} parent=1 // pred_check_branch
      %26 = sbr.rel (0) target = $region17
    $region16: #{dqnet_forward.1} parent=1 // pred_region
      %27 = dma.done [#allocation3], 4352
    $region17: #{dqnet_forward.1} parent=1 // pred_fallthru
      _
    %v28 = vld [vmem:[%s1] sm:$0xff]
    %v29 = vld [vmem:[%s0] sm:$0x1]
    %v31 = vlaneseq
    %v32 = vshrl.u32 %v31, 7
    %v33 = vsub.s32 0, %v32
    %v34 = vrot.slane %v29, %v33
    %v36 = vmul.f32 %v28, %v34
    %v37 = vld [vmem:[#allocation2] sm:$0xf]
    %v38 = vld [vmem:[#allocation2 + $0x8] sm:$0xff]
    %v39 = vld [vmem:[#allocation2 + $0x10] sm:$0xff]
    %v40 = vld [vmem:[#allocation2 + $0x18] sm:$0xff]
    %v41 = vld [vmem:[#allocation2 + $0x20] sm:$0xff]
    %v42 = vld [vmem:[#allocation2 + $0x28] sm:$0xff]
    %v43 = vld [vmem:[#allocation2 + $0x30] sm:$0xff]
    %v44 = vld [vmem:[#allocation2 + $0x38] sm:$0xff]
    %v45 = vld [vmem:[#allocation2 + $0x40] sm:$0xff]
    %v46 = vld [vmem:[#allocation2 + $0x48] sm:$0xff]
    %v47 = vld [vmem:[#allocation2 + $0x50] sm:$0xff]
    %v48 = vld [vmem:[#allocation2 + $0x58] sm:$0xff]
    %v49 = vld [vmem:[#allocation2 + $0x60] sm:$0xff]
    %v50 = vld [vmem:[#allocation2 + $0x68] sm:$0xff]
    %v51 = vld [vmem:[#allocation2 + $0x70] sm:$0xff]
    %v52 = vld [vmem:[#allocation2 + $0x78] sm:$0xff]
    %v53 = vld [vmem:[#allocation2 + $0x80] sm:$0xff]
    %v54 = vld [vmem:[#allocation2 + $0x88] sm:$0xff]
    %v55 = vld [vmem:[#allocation2 + $0x90] sm:$0xff]
    %v56 = vld [vmem:[#allocation2 + $0x98] sm:$0xff]
    %v57 = vld [vmem:[#allocation2 + $0xa0] sm:$0xff]
    %v58 = vld [vmem:[#allocation2 + $0xa8] sm:$0xff]
    %v59 = vld [vmem:[#allocation2 + $0xb0] sm:$0xff]
    %v60 = vld [vmem:[#allocation2 + $0xb8] sm:$0xff]
    %v61 = vld [vmem:[#allocation2 + $0xc0] sm:$0xff]
    %v62 = vld [vmem:[#allocation2 + $0xc8] sm:$0xff]
    %v63 = vld [vmem:[#allocation2 + $0xd0] sm:$0xff]
    %v64 = vld [vmem:[#allocation2 + $0xd8] sm:$0xff]
    %v65 = vld [vmem:[#allocation2 + $0xe0] sm:$0xff]
    %v66 = vld [vmem:[#allocation2 + $0xe8] sm:$0xff]
    %v67 = vld [vmem:[#allocation2 + $0xf0] sm:$0xff]
    %v68 = vld [vmem:[#allocation2 + $0xf8] sm:$0xff]
    %v69 = vld [vmem:[#allocation2 + $0x100] sm:$0xff]
    %v70 = vld [vmem:[#allocation2 + $0x108] sm:$0xff]
    %v71 = vlaneseq
    %v72 = vshrl.u32 %v71, 7
    %v73 = vsub.s32 0, %v72
    %v74 = vrot.slane %v70, %v73
    %vm75 = vcmask 31744
    %v77 = vsel %vm75, %v36, 0
    %vm79 = vcmask 1043456
    %v81 = vsel %vm79, %v37, 0
    %83 = vmatprep.subr.mxu0 0.0
    %84 = vmatpush1.msra.mxu0 %v81
    %85 = vmatprep.subr.mxu0 0.0
    %86 = vmatpush1.msra.mxu0 0.0
    %87 = vmatprep.subr.mxu0 0.0
    %88 = vmatpush1.msra.mxu0 0.0
    %89 = vmatprep.subr.mxu0 0.0
    %90 = vmatpush1.msra.mxu0 0.0
    %91 = vmatprep.subr.mxu0 0.0
    %92 = vmatpush1.msra.mxu0 0.0
    %93 = vmatprep.subr.mxu0 0.0
    %94 = vmatpush1.msra.mxu0 0.0
    %95 = vmatprep.subr.mxu0 0.0
    %96 = vmatpush1.msra.mxu0 0.0
    %97 = vmatprep.subr.mxu0 0.0
    %98 = vmatpush1.msra.mxu0 0.0
    %99 = vmatprep.subr.mxu0 0.0
    %100 = vmatpush1.msra.mxu0 0.0
    %101 = vmatprep.subr.mxu0 0.0
    %102 = vmatpush1.msra.mxu0 0.0
    %103 = vmatprep.subr.mxu0 0.0
    %104 = vmatpush1.msra.mxu0 0.0
    %105 = vmatprep.subr.mxu0 0.0
    %106 = vmatpush1.msra.mxu0 0.0
    %107 = vmatprep.subr.mxu0 0.0
    %108 = vmatpush1.msra.mxu0 0.0
    %109 = vmatprep.subr.mxu0 0.0
    %110 = vmatpush1.msra.mxu0 0.0
    %111 = vmatprep.subr.mxu0 0.0
    %112 = vmatpush1.msra.mxu0 0.0
    %113 = vmatprep.subr.mxu0 0.0
    %114 = vmatpush1.msra.mxu0 0.0
    %115 = vmatprep.subr.mxu0 0.0
    %116 = vmatpush1.msra.mxu0 0.0
    %117 = vmatprep.subr.mxu0 0.0
    %118 = vmatpush1.msra.mxu0 0.0
    %119 = vmatprep.subr.mxu0 0.0
    %120 = vmatpush1.msra.mxu0 0.0
    %121 = vmatprep.subr.mxu0 0.0
    %122 = vmatpush1.msra.mxu0 0.0
    %123 = vmatprep.subr.mxu0 0.0
    %124 = vmatpush1.msra.mxu0 0.0
    %125 = vmatprep.subr.mxu0 0.0
    %126 = vmatpush1.msra.mxu0 0.0
    %127 = vmatprep.subr.mxu0 0.0
    %128 = vmatpush1.msra.mxu0 0.0
    %129 = vmatprep.subr.mxu0 0.0
    %130 = vmatpush1.msra.mxu0 0.0
    %131 = vmatprep.subr.mxu0 0.0
    %132 = vmatpush1.msra.mxu0 0.0
    %133 = vmatprep.subr.mxu0 0.0
    %134 = vmatpush1.msra.mxu0 0.0
    %135 = vmatprep.subr.mxu0 0.0
    %136 = vmatpush1.msra.mxu0 0.0
    %137 = vmatprep.subr.mxu0 0.0
    %138 = vmatpush1.msra.mxu0 0.0
    %139 = vmatprep.subr.mxu0 0.0
    %140 = vmatpush1.msra.mxu0 0.0
    %141 = vmatprep.subr.mxu0 0.0
    %142 = vmatpush1.msra.mxu0 0.0
    %143 = vmatprep.subr.mxu0 0.0
    %144 = vmatpush1.msra.mxu0 0.0
    %145 = vmatprep.subr.mxu0 0.0
    %146 = vmatpush1.msra.mxu0 0.0
    %147 = vmatprep.mubr.f32.mxu0 0.0
    %148 = vmatmul.mubr.f32.gmra.mrb[0].mxu0 %v77
    %v149 = vpop.f32.mrb[0].mxu0
    %v150 = vadd.f32 %v74, %v149
    %v151 = vpop.f32.mrb[0].mxu0
    %152 = vdwg.mxu0
    %v153 = vmax.f32 %v150, 0.0
    %v154 = vlaneseq
    %v155 = vshrl.u32 %v154, 7
    %v156 = vsub.s32 1, %v155
    %v157 = vrot.slane %v70, %v156
    %158 = vmatprep.subr.mxu0 0.0
    %159 = vmatpush1.msra.mxu0 %v38
    %160 = vmatprep.subr.mxu0 0.0
    %161 = vmatpush1.msra.mxu0 %v39
    %162 = vmatprep.subr.mxu0 0.0
    %163 = vmatpush1.msra.mxu0 %v40
    %164 = vmatprep.subr.mxu0 0.0
    %165 = vmatpush1.msra.mxu0 %v41
    %166 = vmatprep.subr.mxu0 0.0
    %167 = vmatpush1.msra.mxu0 %v42
    %168 = vmatprep.subr.mxu0 0.0
    %169 = vmatpush1.msra.mxu0 %v43
    %170 = vmatprep.subr.mxu0 0.0
    %171 = vmatpush1.msra.mxu0 %v44
    %172 = vmatprep.subr.mxu0 0.0
    %173 = vmatpush1.msra.mxu0 %v45
    %174 = vmatprep.subr.mxu0 0.0
    %175 = vmatpush1.msra.mxu0 %v46
    %176 = vmatprep.subr.mxu0 0.0
    %177 = vmatpush1.msra.mxu0 %v47
    %178 = vmatprep.subr.mxu0 0.0
    %179 = vmatpush1.msra.mxu0 %v48
    %180 = vmatprep.subr.mxu0 0.0
    %181 = vmatpush1.msra.mxu0 %v49
    %182 = vmatprep.subr.mxu0 0.0
    %183 = vmatpush1.msra.mxu0 %v50
    %184 = vmatprep.subr.mxu0 0.0
    %185 = vmatpush1.msra.mxu0 %v51
    %186 = vmatprep.subr.mxu0 0.0
    %187 = vmatpush1.msra.mxu0 %v52
    %188 = vmatprep.subr.mxu0 0.0
    %189 = vmatpush1.msra.mxu0 %v53
    %190 = vmatprep.subr.mxu0 0.0
    %191 = vmatpush1.msra.mxu0 0.0
    %192 = vmatprep.subr.mxu0 0.0
    %193 = vmatpush1.msra.mxu0 0.0
    %194 = vmatprep.subr.mxu0 0.0
    %195 = vmatpush1.msra.mxu0 0.0
    %196 = vmatprep.subr.mxu0 0.0
    %197 = vmatpush1.msra.mxu0 0.0
    %198 = vmatprep.subr.mxu0 0.0
    %199 = vmatpush1.msra.mxu0 0.0
    %200 = vmatprep.subr.mxu0 0.0
    %201 = vmatpush1.msra.mxu0 0.0
    %202 = vmatprep.subr.mxu0 0.0
    %203 = vmatpush1.msra.mxu0 0.0
    %204 = vmatprep.subr.mxu0 0.0
    %205 = vmatpush1.msra.mxu0 0.0
    %206 = vmatprep.subr.mxu0 0.0
    %207 = vmatpush1.msra.mxu0 0.0
    %208 = vmatprep.subr.mxu0 0.0
    %209 = vmatpush1.msra.mxu0 0.0
    %210 = vmatprep.subr.mxu0 0.0
    %211 = vmatpush1.msra.mxu0 0.0
    %212 = vmatprep.subr.mxu0 0.0
    %213 = vmatpush1.msra.mxu0 0.0
    %214 = vmatprep.subr.mxu0 0.0
    %215 = vmatpush1.msra.mxu0 0.0
    %216 = vmatprep.subr.mxu0 0.0
    %217 = vmatpush1.msra.mxu0 0.0
    %218 = vmatprep.subr.mxu0 0.0
    %219 = vmatpush1.msra.mxu0 0.0
    %220 = vmatprep.subr.mxu0 0.0
    %221 = vmatpush1.msra.mxu0 0.0
    %222 = vmatprep.mubr.f32.mxu0 0.0
    %223 = vmatmul.mubr.f32.gmra.mrb[0].mxu0 %v153
    %v224 = vpop.f32.mrb[0].mxu0
    %v225 = vadd.f32 %v157, %v224
    %v226 = vpop.f32.mrb[0].mxu0
    %227 = vdwg.mxu0
    %v228 = vmax.f32 %v225, 0.0
    %v229 = vlaneseq
    %v230 = vshrl.u32 %v229, 7
    %v231 = vsub.s32 2, %v230
    %v232 = vrot.slane %v70, %v231
    %233 = vmatprep.subr.mxu0 0.0
    %234 = vmatpush1.msra.mxu0 %v54
    %235 = vmatprep.subr.mxu0 0.0
    %236 = vmatpush1.msra.mxu0 %v55
    %237 = vmatprep.subr.mxu0 0.0
    %238 = vmatpush1.msra.mxu0 %v56
    %239 = vmatprep.subr.mxu0 0.0
    %240 = vmatpush1.msra.mxu0 %v57
    %241 = vmatprep.subr.mxu0 0.0
    %242 = vmatpush1.msra.mxu0 %v58
    %243 = vmatprep.subr.mxu0 0.0
    %244 = vmatpush1.msra.mxu0 %v59
    %245 = vmatprep.subr.mxu0 0.0
    %246 = vmatpush1.msra.mxu0 %v60
    %247 = vmatprep.subr.mxu0 0.0
    %248 = vmatpush1.msra.mxu0 %v61
    %249 = vmatprep.subr.mxu0 0.0
    %250 = vmatpush1.msra.mxu0 %v62
    %251 = vmatprep.subr.mxu0 0.0
    %252 = vmatpush1.msra.mxu0 %v63
    %253 = vmatprep.subr.mxu0 0.0
    %254 = vmatpush1.msra.mxu0 %v64
    %255 = vmatprep.subr.mxu0 0.0
    %256 = vmatpush1.msra.mxu0 %v65
    %257 = vmatprep.subr.mxu0 0.0
    %258 = vmatpush1.msra.mxu0 %v66
    %259 = vmatprep.subr.mxu0 0.0
    %260 = vmatpush1.msra.mxu0 %v67
    %261 = vmatprep.subr.mxu0 0.0
    %262 = vmatpush1.msra.mxu0 %v68
    %263 = vmatprep.subr.mxu0 0.0
    %264 = vmatpush1.msra.mxu0 %v69
    %265 = vmatprep.subr.mxu0 0.0
    %266 = vmatpush1.msra.mxu0 0.0
    %267 = vmatprep.subr.mxu0 0.0
    %268 = vmatpush1.msra.mxu0 0.0
    %269 = vmatprep.subr.mxu0 0.0
    %270 = vmatpush1.msra.mxu0 0.0
    %271 = vmatprep.subr.mxu0 0.0
    %272 = vmatpush1.msra.mxu0 0.0
    %273 = vmatprep.subr.mxu0 0.0
    %274 = vmatpush1.msra.mxu0 0.0
    %275 = vmatprep.subr.mxu0 0.0
    %276 = vmatpush1.msra.mxu0 0.0
    %277 = vmatprep.subr.mxu0 0.0
    %278 = vmatpush1.msra.mxu0 0.0
    %279 = vmatprep.subr.mxu0 0.0
    %280 = vmatpush1.msra.mxu0 0.0
    %281 = vmatprep.subr.mxu0 0.0
    %282 = vmatpush1.msra.mxu0 0.0
    %283 = vmatprep.subr.mxu0 0.0
    %284 = vmatpush1.msra.mxu0 0.0
    %285 = vmatprep.subr.mxu0 0.0
    %286 = vmatpush1.msra.mxu0 0.0
    %287 = vmatprep.subr.mxu0 0.0
    %288 = vmatpush1.msra.mxu0 0.0
    %289 = vmatprep.subr.mxu0 0.0
    %290 = vmatpush1.msra.mxu0 0.0
    %291 = vmatprep.subr.mxu0 0.0
    %292 = vmatpush1.msra.mxu0 0.0
    %293 = vmatprep.subr.mxu0 0.0
    %294 = vmatpush1.msra.mxu0 0.0
    %295 = vmatprep.subr.mxu0 0.0
    %296 = vmatpush1.msra.mxu0 0.0
    %297 = vmatprep.mubr.f32.mxu0 0.0
    %298 = vmatmul.mubr.f32.gmra.mrb[0].mxu0 %v228
    %v299 = vpop.f32.mrb[0].mxu0
    %v300 = vadd.f32 %v232, %v299
    %v301 = vpop.f32.mrb[0].mxu0
    %302 = vdwg.mxu0
    %303 = vst [vmem:[%s3] sm:$0xff] %v300
    // Predicated region
    $region18: #{dqnet_forward.1} parent=1 // pred_check
      _
    $region19: #{dqnet_forward.1} parent=1 // pred_check_branch
      %305 = sbr.rel (0) target = $region21
    $region20: #{dqnet_forward.1} parent=1 // pred_region
      _
    $region21: #{dqnet_forward.1} parent=1 // pred_fallthru
      _
    // Predicated region
    $region22: #{dqnet_forward.1} parent=1 // pred_check
      _
    $region23: #{dqnet_forward.1} parent=1 // pred_check_branch
      %307 = sbr.rel (0) target = $region25
    $region24: #{dqnet_forward.1} parent=1 // pred_region
      _
    $region25: #{dqnet_forward.1} parent=1 // pred_fallthru
      _
    %308 = vsyncpa [#allocation3], 1

</llo_original>
